<compile_context>
chip_gen: v7x
topology: tpu7x:2x2x1
jax: 0.10.0
libtpu: 0.0.40
codegen_flags: <defaults>
</compile_context>

<pallas_src>
import functools

import jax
import jax.numpy as jnp
from jax.experimental import pallas as pl
from jax.experimental.pallas import tpu as pltpu


def _round_up(x, m):
    return ((x + m - 1) // m) * m


def _pick_tile(dim, target, align=128):
    """Largest multiple of `align` that divides `dim` and is <= target."""
    assert dim % align == 0
    if target >= dim:
        return dim
    q = dim // align
    d = max(1, target // align)
    while q % d != 0:
        d -= 1
    return d * align


def _up_matmul_kernel(x_ref, w_ref, o_ref, acc_ref):
    # x_ref: (tm, tk) bf16   w_ref: (tk, tn) bf16   o_ref: (tm, tn) bf16
    k = pl.program_id(2)

    @pl.when(k == 0)
    def _():
        acc_ref[...] = jnp.zeros_like(acc_ref)

    # y += x @ w   (w already stored transposed -> plain NN contraction, MXU
    # gets K on sublanes / N lane-dense with no relayout).
    acc_ref[...] += jnp.dot(
        x_ref[...], w_ref[...], preferred_element_type=jnp.float32
    )

    @pl.when(k == pl.num_programs(2) - 1)
    def _():
        o_ref[...] = acc_ref[...].astype(o_ref.dtype)


@functools.partial(
    jax.jit, static_argnames=("n_valid", "tm", "tn", "tk", "weight_multibuf")
)
def up_matmul_padded(x2d, wt, *, n_valid, tm, tn, tk, weight_multibuf=False):
    """Compute x2d @ W.T where wt = W.T, pre-padded/cast.

    x2d: (M, K)  any float dtype (cast to bf16 for streaming)
    wt:  (Kp, Np) bf16, Kp/Np multiples of 128, Kp >= K (extra rows are zero)
    Returns (M, n_valid) bf16 (fp32 accumulation in-kernel).
    """
    M, K = x2d.shape
    Kp, Np = wt.shape
    assert Kp >= K and Kp % 128 == 0 and Np % 128 == 0 and n_valid <= Np

    # Effective tile sizes (bf16 -> 16-row M alignment; tiles divide padded dims).
    tm_e = min(tm, _round_up(M, 16))
    tk_e = _pick_tile(Kp, tk)
    tn_e = _pick_tile(Np, tn)
    Mp = _round_up(M, tm_e)

    # Only the (small) activation operand is cast / padded per call.
    xb = x2d.astype(jnp.bfloat16)
    if (Mp, Kp) != (M, K):
        xb = jnp.pad(xb, ((0, Mp - M), (0, Kp - K)))

    grid = (Mp // tm_e, Np // tn_e, Kp // tk_e)

    # Decode regime (single M tile): deepen the weight pipeline if there are
    # enough weight tiles to overlap, to keep the HBM pipe full.
    if weight_multibuf and grid[0] == 1 and grid[1] * grid[2] >= 3:
        w_spec = pl.BlockSpec(
            (tk_e, tn_e), lambda i, j, k: (k, j), pipeline_mode=pl.Buffered(3)
        )
    else:
        w_spec = pl.BlockSpec((tk_e, tn_e), lambda i, j, k: (k, j))

    # VMEM budget for this tile config: bf16 input double-buffers + f32
    # accumulator + bf16 output double-buffer (+50% slack).  Capped at 64 MiB
    # so the same config stays legal on v7x's smaller VMEM.
    ws = (
        2 * (tm_e * tk_e + tk_e * tn_e) * 2
        + tm_e * tn_e * 4
        + 2 * tm_e * tn_e * 2
    )
    vmem_limit = int(min(64 * 2**20, max(32 * 2**20, (ws * 3) // 2)))

    out = pl.pallas_call(
        _up_matmul_kernel,
        out_shape=jax.ShapeDtypeStruct((Mp, Np), jnp.bfloat16),
        grid_spec=pltpu.PrefetchScalarGridSpec(
            num_scalar_prefetch=0,
            grid=grid,
            in_specs=[
                pl.BlockSpec((tm_e, tk_e), lambda i, j, k: (i, k)),  # activations
                w_spec,                                              # W^T tiles
            ],
            out_specs=pl.BlockSpec((tm_e, tn_e), lambda i, j, k: (i, j)),
            scratch_shapes=[pltpu.VMEM((tm_e, tn_e), jnp.float32)],
        ),
        compiler_params=pltpu.CompilerParams(
            # M and N tiles are disjoint -> parallel (shards across v7x's 2 TCs);
            # K is the reduction axis -> arbitrary, placed last.
            dimension_semantics=("parallel", "parallel", "arbitrary"),
            vmem_limit_bytes=vmem_limit,
        ),
    )(xb, wt)

    return out[:M, :n_valid]


class UpLayerPallas:
    """JAX/Pallas re-implementation of the PyTorch UpLayer forward pass."""

    def __init__(self, weight, num, sparsity, memory_limit, indices_list_all):
        # weight: (N, K) = (intermediate, hidden).  Stored ONCE as bf16,
        # transposed to (K, N) and zero-padded to 128-multiples so the
        # per-call hot path never re-casts / re-pads / re-lays-out W.
        N, K = weight.shape
        self.out_features = int(N)
        self.in_features = int(K)
        wt = jnp.asarray(weight, dtype=jnp.bfloat16).T  # (K, N)
        self.weight_t = jnp.pad(
            wt,
            ((0, _round_up(K, 128) - K), (0, _round_up(N, 128) - N)),
        )
        self.num = num
        self.memory_limit = memory_limit
        self.indices_list_all = indices_list_all  # list of index arrays
        self.neuron_num = int(N * sparsity)
        # Placeholder like the PyTorch init (overwritten on first decode step).
        self.filtered_Wt = jnp.zeros(
            (self.weight_t.shape[0], _round_up(self.neuron_num, 128)),
            dtype=jnp.bfloat16,
        )
        self.weight_updated = False
        # TODO(synk): the memory_limit CPU<->GPU weight shuffling of the torch
        # module has no Pallas/TPU equivalent; weights live in HBM.

    def __call__(self, x):
        # x: (B, S, H)
        # TODO(synk): the S>1 branch and weight_updated cache are Python-side
        # state (like the torch module) and are not jit/scan trace-safe.
        B, S, H = x.shape
        x2d = x.reshape(B * S, H)
        if S > 1:
            # Prompt phase: dense projection with the full weight.  Big tm so
            # W is streamed from HBM ~once (compute-bound instead of HBM-bound).
            self.weight_updated = False
            y = up_matmul_padded(
                x2d, self.weight_t, n_valid=self.out_features,
                tm=1024, tn=512, tk=1024,
            )
            n_out = self.out_features
        else:
            # Decode phase: projection with the sparsity-filtered weight rows.
            if not self.weight_updated:
                indices = self.indices_list_all[self.num - 6]
                # Glue: row gather of W == column gather of W^T; cast + pad
                # happen ONCE here (amortized by the weight_updated cache).
                cols = jnp.take(
                    self.weight_t[:, : self.out_features], indices, axis=1
                )
                pad_n = _round_up(self.neuron_num, 128) - self.neuron_num
                self.filtered_Wt = jnp.pad(cols, ((0, 0), (0, pad_n)))
                self.weight_updated = True
            # Decode: few activation rows -> large tk (big weight DMAs),
            # moderate tn so the N axis keeps >=2 tiles for v7x's 2 cores.
            y = up_matmul_padded(
                x2d, self.filtered_Wt, n_valid=self.neuron_num,
                tm=16, tn=512, tk=2048, weight_multibuf=True,
            )
            n_out = self.neuron_num
        return y.reshape(B, S, n_out)


if __name__ == "__main__":
    key = jax.random.PRNGKey(0)
    k_w, k_xp, k_xd, k_idx = jax.random.split(key, 4)

    B, S, H = 2, 8, 128         # batch, prompt seq len, hidden
    INTER = 256                 # up-projection output size (weight.size(0))
    SPARSITY = 0.4              # -> 102 neurons: exercises non-128-multiple padding
    NUM = 6                     # layer id; indices_list_all[num - 6]

    weight = jax.random.normal(k_w, (INTER, H), dtype=jnp.float32) * 0.02

    # Deterministic synthetic sparsity indices ("indices_list_all" global).
    neuron_num = int(INTER * SPARSITY)
    indices = jnp.sort(jax.random.permutation(k_idx, INTER)[:neuron_num])
    indices_list_all = [indices]

    layer = UpLayerPallas(weight, NUM, SPARSITY, memory_limit=True,
                          indices_list_all=indices_list_all)

    # --- Prompt phase (S > 1): dense path ---
    x_prompt = jax.random.normal(k_xp, (B, S, H), dtype=jnp.float32)
    y_prompt = jax.block_until_ready(layer(x_prompt))
    ref_prompt = jnp.einsum("bsh,nh->bsn", x_prompt, weight)
    assert y_prompt.shape == (B, S, INTER)
    assert jnp.allclose(y_prompt.astype(jnp.float32), ref_prompt,
                        atol=2e-2, rtol=2e-2), (
        float(jnp.max(jnp.abs(y_prompt.astype(jnp.float32) - ref_prompt))))

    # --- Decode phase (S == 1): filtered-weight path ---
    x_dec = jax.random.normal(k_xd, (B, 1, H), dtype=jnp.float32)
    y_dec = jax.block_until_ready(layer(x_dec))
    ref_dec = jnp.einsum("bsh,nh->bsn", x_dec, weight[indices, :])
    assert y_dec.shape == (B, 1, neuron_num)
    assert jnp.allclose(y_dec.astype(jnp.float32), ref_dec,
                        atol=2e-2, rtol=2e-2), (
        float(jnp.max(jnp.abs(y_dec.astype(jnp.float32) - ref_dec))))

    print("KERNEL_OK")
</pallas_src>

<mosaic_0001>
module attributes {stable_mosaic.version = 11 : i64} {
  func.func @_up_matmul_kernel(%arg0: i32, %arg1: i32, %arg2: i32, %arg3: memref<16x128xbf16, #tpu.memory_space<vmem>>, %arg4: memref<128x256xbf16, #tpu.memory_space<vmem>>, %arg5: memref<16x256xbf16, #tpu.memory_space<vmem>>, %arg6: memref<16x256xf32, #tpu.memory_space<vmem>>) attributes {dimension_semantics = [#tpu.dimension_semantics<parallel>, #tpu.dimension_semantics<parallel>, #tpu.dimension_semantics<arbitrary>], iteration_bounds = array<i64: 1, 1, 1>, scalar_prefetch = 0 : i64, scratch_operands = 1 : i64, tpu.core_type = #tpu.core_type<tc>, window_params = [{transform_indices = @transform_0, window_bounds = array<i64: 16, 128>}, {transform_indices = @transform_1, window_bounds = array<i64: 128, 256>}, {transform_indices = @transform_2, window_bounds = array<i64: 16, 256>}]} {
    %c0_i32 = arith.constant 0 : i32
    %0 = arith.cmpi eq, %arg2, %c0_i32 : i32
    %1 = arith.extui %0 : i1 to i32
    %c0_i32_0 = arith.constant 0 : i32
    %2 = arith.cmpi ne, %1, %c0_i32_0 : i32
    scf.if %2 {
      %cst_10 = arith.constant 0.000000e+00 : f32
      %12 = vector.broadcast %cst_10 : f32 to vector<16x256xf32>
      %c0_11 = arith.constant 0 : index
      %c0_12 = arith.constant 0 : index
      %13 = vector.load %arg6[%c0_11, %c0_12] : memref<16x256xf32, #tpu.memory_space<vmem>>, vector<16x256xf32>
      tpu.vector_store %arg6[%c0_11, %c0_12], %12 {strides = array<i32>} : memref<16x256xf32, #tpu.memory_space<vmem>>, vector<16x256xf32>,
    } else {
    }
    %c0 = arith.constant 0 : index
    %c0_1 = arith.constant 0 : index
    %3 = vector.load %arg6[%c0, %c0_1] : memref<16x256xf32, #tpu.memory_space<vmem>>, vector<16x256xf32>
    %c0_2 = arith.constant 0 : index
    %c0_3 = arith.constant 0 : index
    %4 = vector.load %arg3[%c0_2, %c0_3] : memref<16x128xbf16, #tpu.memory_space<vmem>>, vector<16x128xbf16>
    %c0_4 = arith.constant 0 : index
    %c0_5 = arith.constant 0 : index
    %5 = vector.load %arg4[%c0_4, %c0_5] : memref<128x256xbf16, #tpu.memory_space<vmem>>, vector<128x256xbf16>
    %cst = arith.constant dense<0.000000e+00> : vector<16x256xf32>
    %6 = tpu.matmul %4, %5, %cst {dimension_numbers = #tpu.dot_dimension_numbers<[1], [0], [0], [1], [0, 0, 1, 1], [], []>} : vector<16x128xbf16>, vector<128x256xbf16>, vector<16x256xf32> -> vector<16x256xf32>
    %7 = arith.addf %3, %6 : vector<16x256xf32>
    %c0_6 = arith.constant 0 : index
    %c0_7 = arith.constant 0 : index
    %8 = vector.load %arg6[%c0_6, %c0_7] : memref<16x256xf32, #tpu.memory_space<vmem>>, vector<16x256xf32>
    tpu.vector_store %arg6[%c0_6, %c0_7], %7 {strides = array<i32>} : memref<16x256xf32, #tpu.memory_space<vmem>>, vector<16x256xf32>,
    %c0_i32_8 = arith.constant 0 : i32
    %9 = arith.cmpi eq, %arg2, %c0_i32_8 : i32
    %10 = arith.extui %9 : i1 to i32
    %c0_i32_9 = arith.constant 0 : i32
    %11 = arith.cmpi ne, %10, %c0_i32_9 : i32
    scf.if %11 {
      %c0_10 = arith.constant 0 : index
      %c0_11 = arith.constant 0 : index
      %12 = vector.load %arg6[%c0_10, %c0_11] : memref<16x256xf32, #tpu.memory_space<vmem>>, vector<16x256xf32>
      %13 = arith.truncf %12 : vector<16x256xf32> to vector<16x256xbf16>
      %c0_12 = arith.constant 0 : index
      %c0_13 = arith.constant 0 : index
      %14 = vector.load %arg5[%c0_12, %c0_13] : memref<16x256xbf16, #tpu.memory_space<vmem>>, vector<16x256xbf16>
      tpu.vector_store %arg5[%c0_12, %c0_13], %13 {strides = array<i32>} : memref<16x256xbf16, #tpu.memory_space<vmem>>, vector<16x256xbf16>,
    } else {
    }
    return
  }
  func.func @transform_0(%arg0: i32, %arg1: i32, %arg2: i32) -> (i32, i32) {
    %c0_i32 = arith.constant 0 : i32
    return %arg0, %arg2 : i32, i32
  }
  func.func @transform_1(%arg0: i32, %arg1: i32, %arg2: i32) -> (i32, i32) {
    %c0_i32 = arith.constant 0 : i32
    return %arg2, %arg1 : i32, i32
  }
  func.func @transform_2(%arg0: i32, %arg1: i32, %arg2: i32) -> (i32, i32) {
    %c0_i32 = arith.constant 0 : i32
    return %arg0, %arg1 : i32, i32
  }
}

</mosaic_0001>

<llo_original>
// kernel: up_matmul_padded.1
$region0: #{up_matmul_padded.1}
  #allocation0 [shape = 'u32[]', space=smem, size = 0x4, offset = 0x4, fixed_abs, tag = 'smem constant byte address 0x4 - core index']
  #allocation1 [shape = 'u32[144,128]{1,0:T(1,128)}', space=vmem, size = 0x12000, scoped, tag = 'internal scratch']
  #allocation2 [shape = 'f32[16,256]{1,0:T(8,128)}', space=vmem, size = 0x4000, scoped, tag = 'scratch operand']
  %s0 = inlined_call_operand.vmem [shape: bf16[16,128], index: 0, kind: input, shape index: {}]
  %s1 = inlined_call_operand.hbm [shape: bf16[128,256], index: 1, kind: input, shape index: {}]
  %s2 = inlined_call_operand.hbm [shape: bf16[16,256], index: 2, kind: output, shape index: {}]
  %s3 = sld [smem:[#allocation0]]
  $region30: #{up_matmul_padded.1} parent=0
    _
  %s5 = ssub.s32 1, %s3
  %s6 = scalar_select 0, %s5, %s3
  $region1: #{up_matmul_padded.1} parent=0
    #allocation3 [shape = 'u8[65536]{0}', space=vmem, size = 0x10000, scoped, tag = 'input window, operand 1, single buffered']
    #allocation4 [shape = 's32[1]{0}', space=sflag, size = 0x4, scoped, tag = 'scoped memory for up_matmul_padded.1']
    #allocation5 [shape = 's32[1]{0}', space=sflag, size = 0x4, scoped, tag = 'scoped memory for up_matmul_padded.1']
    #allocation6 [shape = 'u8[8192]{0}', space=vmem, size = 0x2000, scoped, tag = 'output window, operand 0, single buffered']
    %7 = vsyncpa [#allocation4], 0
    %8 = vsyncpa [#allocation5], 0
    // Predicated region
    $region2: #{up_matmul_padded.1} parent=1 // pred_check
      _
    $region3: #{up_matmul_padded.1} parent=1 // pred_check_branch
      %10 = sbr.rel (0) target = $region5
    $region4: #{up_matmul_padded.1} parent=1 // pred_region
      _
    $region5: #{up_matmul_padded.1} parent=1 // pred_fallthru
      _
    // Predicated region
    $region6: #{up_matmul_padded.1} parent=1 // pred_check
      _
    $region7: #{up_matmul_padded.1} parent=1 // pred_check_branch
      %12 = sbr.rel (0) target = $region9
    $region8: #{up_matmul_padded.1} parent=1 // pred_region
      %s14 = ssub.s32 2048, 2048
      %15 = vsyncadd [#allocation4], %s14
      %s16 = sshll.u32 [#allocation3], 4
      %s17 = int_to_ptr.vmem [resolvable:$true] %s16
      %22 = dma.hbm_to_vmem [thread:$0]  %s1, 2048, %s17, [#allocation4], 128, 128, 8
    $region9: #{up_matmul_padded.1} parent=1 // pred_fallthru
      _
    // Predicated region
    $region10: #{up_matmul_padded.1} parent=1 // pred_check
      _
    $region11: #{up_matmul_padded.1} parent=1 // pred_check_branch
      %24 = sbr.rel (0) target = $region13
    $region12: #{up_matmul_padded.1} parent=1 // pred_region
      %25 = dma.done [#allocation4], 2048
    $region13: #{up_matmul_padded.1} parent=1 // pred_fallthru
      _
    %p27 = scmp.eq.s32.totalorder 0, 0
    // Predicated region
    $region14: #{up_matmul_padded.1} parent=1 // pred_check
      %p28 = pneg %p27
    $region15: #{up_matmul_padded.1} parent=1 // pred_check_branch
      %30 = sbr.rel (%p28) target = $region17
    $region16: #{up_matmul_padded.1} parent=1 // pred_region
      %31 = vst [vmem:[#allocation2] sm:$0xff] 0.0
      %32 = vst [vmem:[#allocation2 + $0x8] sm:$0xff] 0.0
      %33 = vst [vmem:[#allocation2 + $0x10] sm:$0xff] 0.0
      %34 = vst [vmem:[#allocation2 + $0x18] sm:$0xff] 0.0
    $region17: #{up_matmul_padded.1} parent=1 // pred_fallthru
      _
    %v35 = vld [vmem:[#allocation2] sm:$0xff]
    %v36 = vld [vmem:[#allocation2 + $0x8] sm:$0xff]
    %v37 = vld [vmem:[#allocation2 + $0x10] sm:$0xff]
    %v38 = vld [vmem:[#allocation2 + $0x18] sm:$0xff]
    %v39 = vld [vmem:[%s0] sm:$0xf]
    %v40 = vld [vmem:[%s0 + $0x4] sm:$0xf]
    %v41 = vld [vmem:[#allocation3] sm:$0xff]
    %v42 = vld [vmem:[#allocation3 + $0x8] sm:$0xff]
    %v43 = vld [vmem:[#allocation3 + $0x10] sm:$0xff]
    %v44 = vld [vmem:[#allocation3 + $0x18] sm:$0xff]
    %v45 = vld [vmem:[#allocation3 + $0x20] sm:$0xff]
    %v46 = vld [vmem:[#allocation3 + $0x28] sm:$0xff]
    %v47 = vld [vmem:[#allocation3 + $0x30] sm:$0xff]
    %v48 = vld [vmem:[#allocation3 + $0x38] sm:$0xff]
    %v49 = vld [vmem:[#allocation3 + $0x40] sm:$0xff]
    %v50 = vld [vmem:[#allocation3 + $0x48] sm:$0xff]
    %v51 = vld [vmem:[#allocation3 + $0x50] sm:$0xff]
    %v52 = vld [vmem:[#allocation3 + $0x58] sm:$0xff]
    %v53 = vld [vmem:[#allocation3 + $0x60] sm:$0xff]
    %v54 = vld [vmem:[#allocation3 + $0x68] sm:$0xff]
    %v55 = vld [vmem:[#allocation3 + $0x70] sm:$0xff]
    %v56 = vld [vmem:[#allocation3 + $0x78] sm:$0xff]
    %v59 = vunpack.c.l.b16 %v39
    %v60 = vunpack.c.l.b16 %v40
    %v61 = vpack.c.b16 %v60, %v59
    %v79 = vunpack.c.l.b16 %v41
    %v80 = vunpack.c.h.b16 %v41
    %v81 = vunpack.c.l.b16 %v42
    %v82 = vunpack.c.h.b16 %v42
    %v83 = vunpack.c.l.b16 %v43
    %v84 = vunpack.c.h.b16 %v43
    %v85 = vunpack.c.l.b16 %v44
    %v86 = vunpack.c.h.b16 %v44
    %v87 = vunpack.c.l.b16 %v45
    %v88 = vunpack.c.h.b16 %v45
    %v89 = vunpack.c.l.b16 %v46
    %v90 = vunpack.c.h.b16 %v46
    %v91 = vunpack.c.l.b16 %v47
    %v92 = vunpack.c.h.b16 %v47
    %v93 = vunpack.c.l.b16 %v48
    %v94 = vunpack.c.h.b16 %v48
    %v95 = vunpack.c.l.b16 %v49
    %v96 = vunpack.c.h.b16 %v49
    %v97 = vunpack.c.l.b16 %v50
    %v98 = vunpack.c.h.b16 %v50
    %v99 = vunpack.c.l.b16 %v51
    %v100 = vunpack.c.h.b16 %v51
    %v101 = vunpack.c.l.b16 %v52
    %v102 = vunpack.c.h.b16 %v52
    %v103 = vunpack.c.l.b16 %v53
    %v104 = vunpack.c.h.b16 %v53
    %v105 = vunpack.c.l.b16 %v54
    %v106 = vunpack.c.h.b16 %v54
    %v107 = vunpack.c.l.b16 %v55
    %v108 = vunpack.c.h.b16 %v55
    %v109 = vunpack.c.l.b16 %v56
    %v110 = vunpack.c.h.b16 %v56
    %v111 = vpack.c.b16 %v81, %v79
    %v112 = vpack.c.b16 %v82, %v80
    %v113 = vpack.c.b16 %v85, %v83
    %v114 = vpack.c.b16 %v86, %v84
    %v115 = vpack.c.b16 %v89, %v87
    %v116 = vpack.c.b16 %v90, %v88
    %v117 = vpack.c.b16 %v93, %v91
    %v118 = vpack.c.b16 %v94, %v92
    %v119 = vpack.c.b16 %v97, %v95
    %v120 = vpack.c.b16 %v98, %v96
    %v121 = vpack.c.b16 %v101, %v99
    %v122 = vpack.c.b16 %v102, %v100
    %v123 = vpack.c.b16 %v105, %v103
    %v124 = vpack.c.b16 %v106, %v104
    %v125 = vpack.c.b16 %v109, %v107
    %v126 = vpack.c.b16 %v110, %v108
    %143 = vmatprep.subr.bf16.mxu0 %v112
    %144 = vmatpush1.bf16.msra.mxu0 %v111
    %145 = vmatprep.subr.bf16.mxu0 %v114
    %146 = vmatpush1.bf16.msra.mxu0 %v113
    %147 = vmatprep.subr.bf16.mxu0 %v116
    %148 = vmatpush1.bf16.msra.mxu0 %v115
    %149 = vmatprep.subr.bf16.mxu0 %v118
    %150 = vmatpush1.bf16.msra.mxu0 %v117
    %151 = vmatprep.subr.bf16.mxu0 %v120
    %152 = vmatpush1.bf16.msra.mxu0 %v119
    %153 = vmatprep.subr.bf16.mxu0 %v122
    %154 = vmatpush1.bf16.msra.mxu0 %v121
    %155 = vmatprep.subr.bf16.mxu0 %v124
    %156 = vmatpush1.bf16.msra.mxu0 %v123
    %157 = vmatprep.subr.bf16.mxu0 %v126
    %158 = vmatpush1.bf16.msra.mxu0 %v125
    %159 = vmatprep.subr.bf16.mxu0 0
    %160 = vmatpush1.bf16.msra.mxu0 0
    %161 = vmatprep.subr.bf16.mxu0 0
    %162 = vmatpush1.bf16.msra.mxu0 0
    %163 = vmatprep.subr.bf16.mxu0 0
    %164 = vmatpush1.bf16.msra.mxu0 0
    %165 = vmatprep.subr.bf16.mxu0 0
    %166 = vmatpush1.bf16.msra.mxu0 0
    %167 = vmatprep.subr.bf16.mxu0 0
    %168 = vmatpush1.bf16.msra.mxu0 0
    %169 = vmatprep.subr.bf16.mxu0 0
    %170 = vmatpush1.bf16.msra.mxu0 0
    %171 = vmatprep.subr.bf16.mxu0 0
    %172 = vmatpush1.bf16.msra.mxu0 0
    %173 = vmatprep.subr.bf16.mxu0 0
    %174 = vmatpush1.bf16.msra.mxu0 0
    %175 = vmatprep.mubr.bf16.mxu0 0
    %176 = vmatmul.mubr.bf16.gmra.mrb[0].mxu0 %v61
    %v177 = vpop.f32.mrb[0].mxu0
    %v178 = vadd.f32 0.0, %v177
    %v179 = vpop.f32.mrb[0].mxu0
    %v180 = vadd.f32 0.0, %v179
    %v181 = vpop.f32.mrb[0].mxu0
    %v182 = vadd.f32 0.0, %v181
    %v183 = vpop.f32.mrb[0].mxu0
    %v184 = vadd.f32 0.0, %v183
    %185 = vdwg.mxu0
    %v186 = vadd.f32 %v35, %v178
    %v187 = vadd.f32 %v36, %v180
    %v188 = vadd.f32 %v37, %v182
    %v189 = vadd.f32 %v38, %v184
    %190 = vst [vmem:[#allocation2] sm:$0xff] %v186
    %191 = vst [vmem:[#allocation2 + $0x8] sm:$0xff] %v187
    %192 = vst [vmem:[#allocation2 + $0x10] sm:$0xff] %v188
    %193 = vst [vmem:[#allocation2 + $0x18] sm:$0xff] %v189
    // Predicated region
    $region18: #{up_matmul_padded.1} parent=1 // pred_check
      %p194 = pneg %p27
    $region19: #{up_matmul_padded.1} parent=1 // pred_check_branch
      %196 = sbr.rel (%p194) target = $region21
    $region20: #{up_matmul_padded.1} parent=1 // pred_region
      %v197 = vld [vmem:[#allocation2] sm:$0xff]
      %v198 = vld [vmem:[#allocation2 + $0x8] sm:$0xff]
      %v199 = vld [vmem:[#allocation2 + $0x10] sm:$0xff]
      %v200 = vld [vmem:[#allocation2 + $0x18] sm:$0xff]
      %v201 = vpack.c.bf16 %v199, %v197
      %v202 = vpack.c.bf16 %v200, %v198
      %v205 = vunpack.c.l.b16 %v201
      %v206 = vunpack.c.l.b16 %v202
      %v207 = vunpack.c.h.b16 %v201
      %v208 = vunpack.c.h.b16 %v202
      %v209 = vpack.c.b16 %v206, %v205
      %v210 = vpack.c.b16 %v208, %v207
      %213 = vst [vmem:[#allocation6] sm:$0xff] %v209
      %214 = vst [vmem:[#allocation6 + $0x8] sm:$0xff] %v210
    $region21: #{up_matmul_padded.1} parent=1 // pred_fallthru
      _
    // Predicated region
    $region22: #{up_matmul_padded.1} parent=1 // pred_check
      _
    $region23: #{up_matmul_padded.1} parent=1 // pred_check_branch
      %216 = sbr.rel (0) target = $region25
    $region24: #{up_matmul_padded.1} parent=1 // pred_region
      %s218 = ssub.s32 256, 256
      %219 = vsyncadd [#allocation5], %s218
      %s220 = sshll.u32 [#allocation6], 4
      %s221 = int_to_ptr.vmem [resolvable:$true] %s220
      %226 = dma.vmem_to_hbm [thread:$0]  %s221, 256, %s2, [#allocation5], 128, 128, 8
    $region25: #{up_matmul_padded.1} parent=1 // pred_fallthru
      _
    // Predicated region
    $region26: #{up_matmul_padded.1} parent=1 // pred_check
      _
    $region27: #{up_matmul_padded.1} parent=1 // pred_check_branch
      %228 = sbr.rel (0) target = $region29
    $region28: #{up_matmul_padded.1} parent=1 // pred_region
      %229 = dma.done [#allocation5], 256
    $region29: #{up_matmul_padded.1} parent=1 // pred_fallthru
      _
    %230 = vsyncpa [#allocation4], 1
    %231 = vsyncpa [#allocation5], 1

</llo_original>
